<compile_context>
chip_gen: v6e
topology: v6e:2x2x1
jax: 0.10.0
libtpu: 0.0.40
codegen_flags: <defaults>
</compile_context>

<pallas_src>
import math

import jax
import jax.numpy as jnp
from jax.experimental import pallas as pl
from jax.experimental.pallas import tpu as pltpu

MAX_GQA_LENGTH = 20
_INV_SQRT2 = 1.0 / math.sqrt(2.0)


def _round_up(n, m):
    return ((n + m - 1) // m) * m


# ----------------------------------------------------------------------------
# Pallas kernel: pooler + logit_fc head, fused.
# ----------------------------------------------------------------------------
def _gqa_head_kernel(z_ref, wp_ref, bp_ref, w1_ref, b1_ref, g_ref, be_ref,
                     w2_ref, b2_ref, out_ref):
    # Pooler: tanh(z @ w_pool + b_pool)  (bf16 MXU, f32 accumulate, EUP tanh)
    p = jnp.dot(z_ref[...], wp_ref[...], preferred_element_type=jnp.float32)
    p = jnp.tanh(p + bp_ref[...])

    # Linear(H, 2H)
    h = jnp.dot(p.astype(w1_ref.dtype), w1_ref[...],
                preferred_element_type=jnp.float32)
    h = h + b1_ref[...]

    # GeLU (exact erf form used by LXMERT): x * 0.5 * (1 + erf(x / sqrt(2)))
    h = h * 0.5 * (1.0 + jax.lax.erf(h * jnp.float32(_INV_SQRT2)))

    # BertLayerNorm(2H, eps=1e-12): biased variance, f32 math, rsqrt on EUP.
    u = jnp.mean(h, axis=-1, keepdims=True)
    c = h - u
    s = jnp.mean(c * c, axis=-1, keepdims=True)
    h = c * jax.lax.rsqrt(s + jnp.float32(1e-12))
    h = h * g_ref[...] + be_ref[...]

    # Linear(2H, A_pad)  (cast to bf16 only after LayerNorm)
    logit = jnp.dot(h.astype(w2_ref.dtype), w2_ref[...],
                    preferred_element_type=jnp.float32)
    out_ref[...] = (logit + b2_ref[...]).astype(out_ref.dtype)


def gqa_head_pallas(z, w_pool, b_pool, w1, b1, gamma, beta, w2, b2, *,
                    batch_tile=256):
    """Fused pooler + logit_fc head.  z: (B, H) -> logits: (B, A)."""
    B, H = z.shape
    H2 = w1.shape[1]
    A = w2.shape[1]

    # Lane-dense output: pad num_answers to a multiple of 128.
    A_pad = _round_up(A, 128)
    # Sublane-aligned batch tile (multiple of 256 on big B -> good v6e MXU fill).
    tb = min(_round_up(batch_tile, 8), _round_up(B, 8))
    B_pad = _round_up(B, tb)

    z = z.astype(jnp.bfloat16)
    if B_pad != B:
        z = jnp.pad(z, ((0, B_pad - B), (0, 0)))
    if A_pad != A:
        w2 = jnp.pad(w2, ((0, 0), (0, A_pad - A)))
        b2 = jnp.pad(b2, ((0, 0), (0, A_pad - A)))

    grid = (B_pad // tb,)
    stream = lambda i: (i, 0)      # activations / logits stream over batch tiles
    resident = lambda i: (0, 0)    # weights & biases stay resident in VMEM

    out = pl.pallas_call(
        _gqa_head_kernel,
        out_shape=jax.ShapeDtypeStruct((B_pad, A_pad), jnp.float32),
        grid=grid,
        in_specs=[
            pl.BlockSpec((tb, H), stream),            # z tile (bf16)
            pl.BlockSpec((H, H), resident),           # w_pool (bf16)
            pl.BlockSpec((1, H), resident),           # b_pool (f32)
            pl.BlockSpec((H, H2), resident),          # w1 (bf16)
            pl.BlockSpec((1, H2), resident),          # b1 (f32)
            pl.BlockSpec((1, H2), resident),          # gamma (f32)
            pl.BlockSpec((1, H2), resident),          # beta (f32)
            pl.BlockSpec((H2, A_pad), resident),      # w2 (bf16, padded)
            pl.BlockSpec((1, A_pad), resident),       # b2 (f32, padded)
        ],
        out_specs=pl.BlockSpec((tb, A_pad), stream),
        compiler_params=pltpu.CompilerParams(
            dimension_semantics=("parallel",)),       # megacore on v7x
    )(z, w_pool, b_pool, w1, b1, gamma, beta, w2, b2)

    return out[:B, :A]


# ----------------------------------------------------------------------------
# Surrogate LXRT encoder (plain-JAX glue producing the pre-pool feature z)
# ----------------------------------------------------------------------------
# TODO(synk): the real LXRTEncoder is a pretrained 9+5+5-layer cross-modal BERT
# operating on tokenized strings; tokenization and the full transformer stack
# have no clean in-script Pallas equivalent, so a deterministic surrogate
# (embedding lookup + visual projection) produces z: (B, H); its tanh pooler
# matmul is fused into the Pallas head kernel above.
def surrogate_lxrt_features(params, sent_ids, feat, pos):
    emb = params["word_emb"][sent_ids]                 # (B, L, H)
    lang = jnp.mean(emb, axis=1)                       # (B, H)
    vis = jnp.dot(feat, params["w_vis"]) + jnp.dot(pos, params["w_pos"])
    vis = jnp.mean(vis, axis=1)                        # (B, H)
    return lang + vis                                  # (B, H)


# ----------------------------------------------------------------------------
# Parameter construction (deterministic, BERT-style init: normal(0, 0.02))
# ----------------------------------------------------------------------------
def make_params(key, vocab, hid_dim, feat_dim, num_answers):
    ks = jax.random.split(key, 8)
    n32 = lambda k, s: (0.02 * jax.random.normal(k, s)).astype(jnp.float32)
    n16 = lambda k, s: (0.02 * jax.random.normal(k, s)).astype(jnp.bfloat16)
    return {
        # surrogate encoder (plain JAX part)
        "word_emb": n32(ks[0], (vocab, hid_dim)),
        "w_vis":    n32(ks[1], (feat_dim, hid_dim)),
        "w_pos":    n32(ks[2], (4, hid_dim)),
        # pooler (fused into the Pallas head kernel), bf16 MXU operand
        "w_pool":   n16(ks[3], (hid_dim, hid_dim)),
        "b_pool":   jnp.zeros((1, hid_dim), jnp.float32),
        # logit_fc head: bf16 weights (halved DMA), f32 biases / LN params
        "w1":    n16(ks[4], (hid_dim, hid_dim * 2)),
        "b1":    jnp.zeros((1, hid_dim * 2), jnp.float32),
        "gamma": jnp.ones((1, hid_dim * 2), jnp.float32),
        "beta":  jnp.zeros((1, hid_dim * 2), jnp.float32),
        "w2":    n16(ks[5], (hid_dim * 2, num_answers)),
        "b2":    jnp.zeros((1, num_answers), jnp.float32),
    }


def gqa_model_forward(params, feat, pos, sent_ids):
    """feat: (B, O, F), pos: (B, O, 4), sent_ids: (B, MAX_GQA_LENGTH) int32."""
    z = surrogate_lxrt_features(params, sent_ids, feat, pos)   # (B, H)
    logit = gqa_head_pallas(z, params["w_pool"], params["b_pool"],
                            params["w1"], params["b1"], params["gamma"],
                            params["beta"], params["w2"], params["b2"])
    return logit                                               # (B, num_answers)


if __name__ == "__main__":
    B, O, F = 2, 8, 64          # batch, objects, visual feature size
    HID = 32                    # hidden dim
    NUM_ANSWERS = 16
    VOCAB = 100

    key = jax.random.PRNGKey(0)
    k_p, k_f, k_pos, k_s = jax.random.split(key, 4)

    params = make_params(k_p, VOCAB, HID, F, NUM_ANSWERS)
    feat = jax.random.normal(k_f, (B, O, F), dtype=jnp.float32)
    pos = jax.random.uniform(k_pos, (B, O, 4), dtype=jnp.float32)
    sent_ids = jax.random.randint(k_s, (B, MAX_GQA_LENGTH), 0, VOCAB)

    fwd = jax.jit(gqa_model_forward)
    logits = fwd(params, feat, pos, sent_ids)
    logits = jax.block_until_ready(logits)
    assert logits.shape == (B, NUM_ANSWERS)
    assert bool(jnp.all(jnp.isfinite(logits)))
    print("KERNEL_OK")
</pallas_src>

<mosaic_0001>
module attributes {stable_mosaic.version = 11 : i64} {
  func.func @_gqa_head_kernel(%arg0: i32, %arg1: memref<8x32xbf16, #tpu.memory_space<vmem>>, %arg2: memref<32x32xbf16, #tpu.memory_space<vmem>>, %arg3: memref<1x32xf32, #tpu.memory_space<vmem>>, %arg4: memref<32x64xbf16, #tpu.memory_space<vmem>>, %arg5: memref<1x64xf32, #tpu.memory_space<vmem>>, %arg6: memref<1x64xf32, #tpu.memory_space<vmem>>, %arg7: memref<1x64xf32, #tpu.memory_space<vmem>>, %arg8: memref<64x128xbf16, #tpu.memory_space<vmem>>, %arg9: memref<1x128xf32, #tpu.memory_space<vmem>>, %arg10: memref<8x128xf32, #tpu.memory_space<vmem>>) attributes {dimension_semantics = [#tpu.dimension_semantics<parallel>], iteration_bounds = array<i64: 1>, scalar_prefetch = 0 : i64, scratch_operands = 0 : i64, tpu.core_type = #tpu.core_type<tc>, window_params = [{transform_indices = @transform_0, window_bounds = array<i64: 8, 32>}, {pipeline_mode = #tpu.pipeline_mode<synchronous>, transform_indices = @transform_1, window_bounds = array<i64: 32, 32>}, {pipeline_mode = #tpu.pipeline_mode<synchronous>, transform_indices = @transform_2, window_bounds = array<i64: 1, 32>}, {pipeline_mode = #tpu.pipeline_mode<synchronous>, transform_indices = @transform_3, window_bounds = array<i64: 32, 64>}, {pipeline_mode = #tpu.pipeline_mode<synchronous>, transform_indices = @transform_4, window_bounds = array<i64: 1, 64>}, {pipeline_mode = #tpu.pipeline_mode<synchronous>, transform_indices = @transform_5, window_bounds = array<i64: 1, 64>}, {pipeline_mode = #tpu.pipeline_mode<synchronous>, transform_indices = @transform_6, window_bounds = array<i64: 1, 64>}, {pipeline_mode = #tpu.pipeline_mode<synchronous>, transform_indices = @transform_7, window_bounds = array<i64: 64, 128>}, {pipeline_mode = #tpu.pipeline_mode<synchronous>, transform_indices = @transform_8, window_bounds = array<i64: 1, 128>}, {transform_indices = @transform_9, window_bounds = array<i64: 8, 128>}]} {
    %c0 = arith.constant 0 : index
    %c0_0 = arith.constant 0 : index
    %0 = vector.load %arg1[%c0, %c0_0] : memref<8x32xbf16, #tpu.memory_space<vmem>>, vector<8x32xbf16>
    %c0_1 = arith.constant 0 : index
    %c0_2 = arith.constant 0 : index
    %1 = vector.load %arg2[%c0_1, %c0_2] : memref<32x32xbf16, #tpu.memory_space<vmem>>, vector<32x32xbf16>
    %cst = arith.constant dense<0.000000e+00> : vector<8x32xf32>
    %2 = tpu.matmul %0, %1, %cst {dimension_numbers = #tpu.dot_dimension_numbers<[1], [0], [0], [1], [0, 0, 1, 1], [], []>} : vector<8x32xbf16>, vector<32x32xbf16>, vector<8x32xf32> -> vector<8x32xf32>
    %c0_3 = arith.constant 0 : index
    %c0_4 = arith.constant 0 : index
    %3 = vector.load %arg3[%c0_3, %c0_4] : memref<1x32xf32, #tpu.memory_space<vmem>>, vector<1x32xf32>
    %4 = vector.broadcast %3 : vector<1x32xf32> to vector<8x32xf32>
    %5 = arith.addf %2, %4 : vector<8x32xf32>
    %6 = math.tanh %5 : vector<8x32xf32>
    %7 = arith.truncf %6 : vector<8x32xf32> to vector<8x32xbf16>
    %c0_5 = arith.constant 0 : index
    %c0_6 = arith.constant 0 : index
    %8 = vector.load %arg4[%c0_5, %c0_6] : memref<32x64xbf16, #tpu.memory_space<vmem>>, vector<32x64xbf16>
    %cst_7 = arith.constant dense<0.000000e+00> : vector<8x64xf32>
    %9 = tpu.matmul %7, %8, %cst_7 {dimension_numbers = #tpu.dot_dimension_numbers<[1], [0], [0], [1], [0, 0, 1, 1], [], []>} : vector<8x32xbf16>, vector<32x64xbf16>, vector<8x64xf32> -> vector<8x64xf32>
    %c0_8 = arith.constant 0 : index
    %c0_9 = arith.constant 0 : index
    %10 = vector.load %arg5[%c0_8, %c0_9] : memref<1x64xf32, #tpu.memory_space<vmem>>, vector<1x64xf32>
    %11 = vector.broadcast %10 : vector<1x64xf32> to vector<8x64xf32>
    %12 = arith.addf %9, %11 : vector<8x64xf32>
    %cst_10 = arith.constant 5.000000e-01 : f32
    %13 = vector.broadcast %cst_10 : f32 to vector<8x64xf32>
    %14 = arith.mulf %12, %13 : vector<8x64xf32>
    %cst_11 = arith.constant 0.707106769 : f32
    %15 = vector.broadcast %cst_11 : f32 to vector<8x64xf32>
    %16 = arith.mulf %12, %15 : vector<8x64xf32>
    %17 = math.erf %16 : vector<8x64xf32>
    %cst_12 = arith.constant 1.000000e+00 : f32
    %18 = vector.broadcast %cst_12 : f32 to vector<8x64xf32>
    %19 = arith.addf %18, %17 : vector<8x64xf32>
    %20 = arith.mulf %14, %19 : vector<8x64xf32>
    %cst_13 = arith.constant dense<0.000000e+00> : vector<8xf32>
    %21 = vector.multi_reduction <add>, %20, %cst_13 [1] : vector<8x64xf32> to vector<8xf32>
    %22 = vector.shape_cast %21 : vector<8xf32> to vector<8x1xf32>
    %cst_14 = arith.constant 6.400000e+01 : f32
    %23 = vector.broadcast %cst_14 : f32 to vector<8x1xf32>
    %24 = arith.divf %22, %23 : vector<8x1xf32>
    %25 = vector.broadcast %24 : vector<8x1xf32> to vector<8x64xf32>
    %26 = arith.subf %20, %25 : vector<8x64xf32>
    %27 = arith.mulf %26, %26 : vector<8x64xf32>
    %cst_15 = arith.constant dense<0.000000e+00> : vector<8xf32>
    %28 = vector.multi_reduction <add>, %27, %cst_15 [1] : vector<8x64xf32> to vector<8xf32>
    %29 = vector.shape_cast %28 : vector<8xf32> to vector<8x1xf32>
    %cst_16 = arith.constant 6.400000e+01 : f32
    %30 = vector.broadcast %cst_16 : f32 to vector<8x1xf32>
    %31 = arith.divf %29, %30 : vector<8x1xf32>
    %cst_17 = arith.constant 9.99999996E-13 : f32
    %32 = vector.broadcast %cst_17 : f32 to vector<8x1xf32>
    %33 = arith.addf %31, %32 : vector<8x1xf32>
    %34 = math.rsqrt %33 : vector<8x1xf32>
    %35 = vector.broadcast %34 : vector<8x1xf32> to vector<8x64xf32>
    %36 = arith.mulf %26, %35 : vector<8x64xf32>
    %c0_18 = arith.constant 0 : index
    %c0_19 = arith.constant 0 : index
    %37 = vector.load %arg6[%c0_18, %c0_19] : memref<1x64xf32, #tpu.memory_space<vmem>>, vector<1x64xf32>
    %38 = vector.broadcast %37 : vector<1x64xf32> to vector<8x64xf32>
    %39 = arith.mulf %36, %38 : vector<8x64xf32>
    %c0_20 = arith.constant 0 : index
    %c0_21 = arith.constant 0 : index
    %40 = vector.load %arg7[%c0_20, %c0_21] : memref<1x64xf32, #tpu.memory_space<vmem>>, vector<1x64xf32>
    %41 = vector.broadcast %40 : vector<1x64xf32> to vector<8x64xf32>
    %42 = arith.addf %39, %41 : vector<8x64xf32>
    %43 = arith.truncf %42 : vector<8x64xf32> to vector<8x64xbf16>
    %c0_22 = arith.constant 0 : index
    %c0_23 = arith.constant 0 : index
    %44 = vector.load %arg8[%c0_22, %c0_23] : memref<64x128xbf16, #tpu.memory_space<vmem>>, vector<64x128xbf16>
    %cst_24 = arith.constant dense<0.000000e+00> : vector<8x128xf32>
    %45 = tpu.matmul %43, %44, %cst_24 {dimension_numbers = #tpu.dot_dimension_numbers<[1], [0], [0], [1], [0, 0, 1, 1], [], []>} : vector<8x64xbf16>, vector<64x128xbf16>, vector<8x128xf32> -> vector<8x128xf32>
    %c0_25 = arith.constant 0 : index
    %c0_26 = arith.constant 0 : index
    %46 = vector.load %arg9[%c0_25, %c0_26] : memref<1x128xf32, #tpu.memory_space<vmem>>, vector<1x128xf32>
    %47 = vector.broadcast %46 : vector<1x128xf32> to vector<8x128xf32>
    %48 = arith.addf %45, %47 : vector<8x128xf32>
    %c0_27 = arith.constant 0 : index
    %c0_28 = arith.constant 0 : index
    %49 = vector.load %arg10[%c0_27, %c0_28] : memref<8x128xf32, #tpu.memory_space<vmem>>, vector<8x128xf32>
    tpu.vector_store %arg10[%c0_27, %c0_28], %48 {strides = array<i32>} : memref<8x128xf32, #tpu.memory_space<vmem>>, vector<8x128xf32>,
    return
  }
  func.func @transform_0(%arg0: i32) -> (i32, i32) {
    %c0_i32 = arith.constant 0 : i32
    %c0_i32_0 = arith.constant 0 : i32
    return %arg0, %c0_i32 : i32, i32
  }
  func.func @transform_1(%arg0: i32) -> (i32, i32) {
    %c0_i32 = arith.constant 0 : i32
    %c0_i32_0 = arith.constant 0 : i32
    %c0_i32_1 = arith.constant 0 : i32
    return %c0_i32, %c0_i32_0 : i32, i32
  }
  func.func @transform_2(%arg0: i32) -> (i32, i32) {
    %c0_i32 = arith.constant 0 : i32
    %c0_i32_0 = arith.constant 0 : i32
    %c0_i32_1 = arith.constant 0 : i32
    return %c0_i32, %c0_i32_0 : i32, i32
  }
  func.func @transform_3(%arg0: i32) -> (i32, i32) {
    %c0_i32 = arith.constant 0 : i32
    %c0_i32_0 = arith.constant 0 : i32
    %c0_i32_1 = arith.constant 0 : i32
    return %c0_i32, %c0_i32_0 : i32, i32
  }
  func.func @transform_4(%arg0: i32) -> (i32, i32) {
    %c0_i32 = arith.constant 0 : i32
    %c0_i32_0 = arith.constant 0 : i32
    %c0_i32_1 = arith.constant 0 : i32
    return %c0_i32, %c0_i32_0 : i32, i32
  }
  func.func @transform_5(%arg0: i32) -> (i32, i32) {
    %c0_i32 = arith.constant 0 : i32
    %c0_i32_0 = arith.constant 0 : i32
    %c0_i32_1 = arith.constant 0 : i32
    return %c0_i32, %c0_i32_0 : i32, i32
  }
  func.func @transform_6(%arg0: i32) -> (i32, i32) {
    %c0_i32 = arith.constant 0 : i32
    %c0_i32_0 = arith.constant 0 : i32
    %c0_i32_1 = arith.constant 0 : i32
    return %c0_i32, %c0_i32_0 : i32, i32
  }
  func.func @transform_7(%arg0: i32) -> (i32, i32) {
    %c0_i32 = arith.constant 0 : i32
    %c0_i32_0 = arith.constant 0 : i32
    %c0_i32_1 = arith.constant 0 : i32
    return %c0_i32, %c0_i32_0 : i32, i32
  }
  func.func @transform_8(%arg0: i32) -> (i32, i32) {
    %c0_i32 = arith.constant 0 : i32
    %c0_i32_0 = arith.constant 0 : i32
    %c0_i32_1 = arith.constant 0 : i32
    return %c0_i32, %c0_i32_0 : i32, i32
  }
  func.func @transform_9(%arg0: i32) -> (i32, i32) {
    %c0_i32 = arith.constant 0 : i32
    %c0_i32_0 = arith.constant 0 : i32
    return %arg0, %c0_i32 : i32, i32
  }
}

</mosaic_0001>

<llo_original>
// kernel: gqa_model_forward.1
$region0: #{gqa_model_forward.1}
  #allocation0 [shape = 'u32[]', space=smem, size = 0x4, offset = 0x4, fixed_abs, tag = 'smem constant byte address 0x4 - core index']
  #allocation1 [shape = 'u32[144,128]{1,0:T(1,128)}', space=vmem, size = 0x12000, scoped, tag = 'internal scratch']
  %s0 = inlined_call_operand.vmem [shape: bf16[8,32], index: 0, kind: input, shape index: {}]
  %s1 = inlined_call_operand.vmem [shape: bf16[32,32], index: 1, kind: input, shape index: {}]
  %s2 = inlined_call_operand.vmem [shape: f32[1,32], index: 2, kind: input, shape index: {}]
  %s3 = inlined_call_operand.vmem [shape: bf16[32,64], index: 3, kind: input, shape index: {}]
  %s4 = inlined_call_operand.vmem [shape: f32[1,64], index: 4, kind: input, shape index: {}]
  %s5 = inlined_call_operand.vmem [shape: f32[1,64], index: 5, kind: input, shape index: {}]
  %s6 = inlined_call_operand.vmem [shape: f32[1,64], index: 6, kind: input, shape index: {}]
  %s7 = inlined_call_operand.vmem [shape: bf16[64,128], index: 7, kind: input, shape index: {}]
  %s8 = inlined_call_operand.vmem [shape: f32[1,128], index: 8, kind: input, shape index: {}]
  %s9 = inlined_call_operand.vmem [shape: f32[8,128], index: 9, kind: output, shape index: {}]
  %s10 = sld [smem:[#allocation0]]
  $region46: #{gqa_model_forward.1} parent=0
    _
  %s12 = ssub.s32 1, %s10
  %s13 = scalar_select 0, %s12, %s10
  // Predicated region
  $region2: #{gqa_model_forward.1} parent=0 // pred_check
    _
  $region3: #{gqa_model_forward.1} parent=0 // pred_check_branch
    %15 = sbr.rel (0) target = $region5
  $region4: #{gqa_model_forward.1} parent=0 // pred_region
    _
  $region5: #{gqa_model_forward.1} parent=0 // pred_fallthru
    _
  // Predicated region
  $region6: #{gqa_model_forward.1} parent=0 // pred_check
    _
  $region7: #{gqa_model_forward.1} parent=0 // pred_check_branch
    %17 = sbr.rel (0) target = $region9
  $region8: #{gqa_model_forward.1} parent=0 // pred_region
    _
  $region9: #{gqa_model_forward.1} parent=0 // pred_fallthru
    _
  // Predicated region
  $region10: #{gqa_model_forward.1} parent=0 // pred_check
    _
  $region11: #{gqa_model_forward.1} parent=0 // pred_check_branch
    %19 = sbr.rel (0) target = $region13
  $region12: #{gqa_model_forward.1} parent=0 // pred_region
    _
  $region13: #{gqa_model_forward.1} parent=0 // pred_fallthru
    _
  // Predicated region
  $region14: #{gqa_model_forward.1} parent=0 // pred_check
    _
  $region15: #{gqa_model_forward.1} parent=0 // pred_check_branch
    %21 = sbr.rel (0) target = $region17
  $region16: #{gqa_model_forward.1} parent=0 // pred_region
    _
  $region17: #{gqa_model_forward.1} parent=0 // pred_fallthru
    _
  // Predicated region
  $region18: #{gqa_model_forward.1} parent=0 // pred_check
    _
  $region19: #{gqa_model_forward.1} parent=0 // pred_check_branch
    %23 = sbr.rel (0) target = $region21
  $region20: #{gqa_model_forward.1} parent=0 // pred_region
    _
  $region21: #{gqa_model_forward.1} parent=0 // pred_fallthru
    _
  // Predicated region
  $region22: #{gqa_model_forward.1} parent=0 // pred_check
    _
  $region23: #{gqa_model_forward.1} parent=0 // pred_check_branch
    %25 = sbr.rel (0) target = $region25
  $region24: #{gqa_model_forward.1} parent=0 // pred_region
    _
  $region25: #{gqa_model_forward.1} parent=0 // pred_fallthru
    _
  // Predicated region
  $region26: #{gqa_model_forward.1} parent=0 // pred_check
    _
  $region27: #{gqa_model_forward.1} parent=0 // pred_check_branch
    %27 = sbr.rel (0) target = $region29
  $region28: #{gqa_model_forward.1} parent=0 // pred_region
    _
  $region29: #{gqa_model_forward.1} parent=0 // pred_fallthru
    _
  // Predicated region
  $region30: #{gqa_model_forward.1} parent=0 // pred_check
    _
  $region31: #{gqa_model_forward.1} parent=0 // pred_check_branch
    %29 = sbr.rel (0) target = $region33
  $region32: #{gqa_model_forward.1} parent=0 // pred_region
    _
  $region33: #{gqa_model_forward.1} parent=0 // pred_fallthru
    _
  // Predicated region
  $region34: #{gqa_model_forward.1} parent=0 // pred_check
    _
  $region35: #{gqa_model_forward.1} parent=0 // pred_check_branch
    %31 = sbr.rel (0) target = $region37
  $region36: #{gqa_model_forward.1} parent=0 // pred_region
    _
  $region37: #{gqa_model_forward.1} parent=0 // pred_fallthru
    _
  %v33 = vld [vmem:[%s0] sm:$0xf]
  %v34 = vld [vmem:[%s1] sm:$0xf]
  %v35 = vld [vmem:[%s1 + $0x4] sm:$0xf]
  %v36 = vld [vmem:[%s1 + $0x8] sm:$0xf]
  %v37 = vld [vmem:[%s1 + $0xc] sm:$0xf]
  %v38 = vld [vmem:[%s2] sm:$0x1]
  %v40 = vlaneseq
  %v41 = vshrl.u32 %v40, 7
  %v42 = vsub.s32 0, %v41
  %v43 = vrot.slane %v38, %v42
  %v49 = vunpack.c.l.b16 %v34
  %v50 = vunpack.c.l.b16 %v35
  %v51 = vunpack.c.l.b16 %v36
  %v52 = vunpack.c.l.b16 %v37
  %v53 = vpack.c.b16 %v50, %v49
  %v54 = vpack.c.b16 %v52, %v51
  %vm57 = vcmask 261120
  %v59 = vsel %vm57, %v33, 0
  %61 = vmatprep.subr.bf16.mxu0 0
  %62 = vmatpush1.bf16.msra.mxu0 0
  %63 = vmatprep.subr.bf16.mxu0 0
  %64 = vmatpush1.bf16.msra.mxu0 0
  %65 = vmatprep.subr.bf16.mxu0 0
  %66 = vmatpush1.bf16.msra.mxu0 0
  %67 = vmatprep.subr.bf16.mxu0 0
  %68 = vmatpush1.bf16.msra.mxu0 0
  %69 = vmatprep.subr.bf16.mxu0 0
  %70 = vmatpush1.bf16.msra.mxu0 0
  %71 = vmatprep.subr.bf16.mxu0 0
  %72 = vmatpush1.bf16.msra.mxu0 0
  %73 = vmatprep.subr.bf16.mxu0 0
  %74 = vmatpush1.bf16.msra.mxu0 %v54
  %75 = vmatprep.subr.bf16.mxu0 0
  %76 = vmatpush1.bf16.msra.mxu0 %v53
  %77 = vmatprep.subr.bf16.mxu0 0
  %78 = vmatpush2.bf16.msra.mxu0 0
  %79 = vmatprep.subr.bf16.mxu0 0
  %80 = vmatpush2.bf16.msra.mxu0 0
  %81 = vmatprep.subr.bf16.mxu0 0
  %82 = vmatpush2.bf16.msra.mxu0 0
  %83 = vmatprep.subr.bf16.mxu0 0
  %84 = vmatpush2.bf16.msra.mxu0 0
  %85 = vmatprep.subr.bf16.mxu0 0
  %86 = vmatpush2.bf16.msra.mxu0 0
  %87 = vmatprep.subr.bf16.mxu0 0
  %88 = vmatpush2.bf16.msra.mxu0 0
  %89 = vmatprep.subr.bf16.mxu0 0
  %90 = vmatpush2.bf16.msra.mxu0 0
  %91 = vmatprep.subr.bf16.mxu0 0
  %92 = vmatpush2.bf16.msra.mxu0 0
  %93 = vmatprep.mubr.bf16.mxu0 0
  %94 = vmatmul.mubr.bf16.gmra.mxu0 %v59
  %v95 = vpop.f32.mrf.mxu0
  %v96 = vadd.f32 %v43, %v95
  %v97 = vpop.f32.mrf.mxu0
  %v98 = vpop.f32.mrf.mxu0
  %v99 = vpop.f32.mrf.mxu0
  %100 = vdwg.mxu0
  %v101 = vtanh.pop %v96
  %v102 = vpack.c.bf16 %v101, %v101
  %v103 = vld [vmem:[%s3] sm:$0xf]
  %v104 = vld [vmem:[%s3 + $0x4] sm:$0xf]
  %v105 = vld [vmem:[%s3 + $0x8] sm:$0xf]
  %v106 = vld [vmem:[%s3 + $0xc] sm:$0xf]
  %v107 = vld [vmem:[%s4] sm:$0x1]
  %v109 = vlaneseq
  %v110 = vshrl.u32 %v109, 7
  %v111 = vsub.s32 0, %v110
  %v112 = vrot.slane %v107, %v111
  %v118 = vunpack.c.l.b16 %v103
  %v119 = vunpack.c.l.b16 %v104
  %v120 = vunpack.c.l.b16 %v105
  %v121 = vunpack.c.l.b16 %v106
  %v122 = vpack.c.b16 %v119, %v118
  %v123 = vpack.c.b16 %v121, %v120
  %v127 = vsel %vm57, %v102, 0
  %129 = vmatprep.subr.bf16.mxu0 0
  %130 = vmatpush1.bf16.msra.mxu0 0
  %131 = vmatprep.subr.bf16.mxu0 0
  %132 = vmatpush1.bf16.msra.mxu0 0
  %133 = vmatprep.subr.bf16.mxu0 0
  %134 = vmatpush1.bf16.msra.mxu0 0
  %135 = vmatprep.subr.bf16.mxu0 0
  %136 = vmatpush1.bf16.msra.mxu0 0
  %137 = vmatprep.subr.bf16.mxu0 0
  %138 = vmatpush1.bf16.msra.mxu0 0
  %139 = vmatprep.subr.bf16.mxu0 0
  %140 = vmatpush1.bf16.msra.mxu0 0
  %141 = vmatprep.subr.bf16.mxu0 0
  %142 = vmatpush1.bf16.msra.mxu0 %v123
  %143 = vmatprep.subr.bf16.mxu0 0
  %144 = vmatpush1.bf16.msra.mxu0 %v122
  %145 = vmatprep.subr.bf16.mxu0 0
  %146 = vmatpush2.bf16.msra.mxu0 0
  %147 = vmatprep.subr.bf16.mxu0 0
  %148 = vmatpush2.bf16.msra.mxu0 0
  %149 = vmatprep.subr.bf16.mxu0 0
  %150 = vmatpush2.bf16.msra.mxu0 0
  %151 = vmatprep.subr.bf16.mxu0 0
  %152 = vmatpush2.bf16.msra.mxu0 0
  %153 = vmatprep.subr.bf16.mxu0 0
  %154 = vmatpush2.bf16.msra.mxu0 0
  %155 = vmatprep.subr.bf16.mxu0 0
  %156 = vmatpush2.bf16.msra.mxu0 0
  %157 = vmatprep.subr.bf16.mxu0 0
  %158 = vmatpush2.bf16.msra.mxu0 0
  %159 = vmatprep.subr.bf16.mxu0 0
  %160 = vmatpush2.bf16.msra.mxu0 0
  %161 = vmatprep.mubr.bf16.mxu0 0
  %162 = vmatmul.mubr.bf16.gmra.mxu0 %v127
  %v163 = vpop.f32.mrf.mxu0
  %v164 = vadd.f32 %v112, %v163
  %v165 = vpop.f32.mrf.mxu0
  %v166 = vpop.f32.mrf.mxu0
  %v167 = vpop.f32.mrf.mxu0
  %168 = vdwg.mxu0
  %v169 = vmul.f32 %v164, 0.5
  %v170 = vmul.f32 %v164, 0.70710677
  %v171 = verf.f32.pop %v170
  %v172 = vadd.f32 %v171, 1.0
  %v173 = vmul.f32 %v169, %v172
  %vm174 = vcmask 523264
  %v175 = vsel %vm174, %v173, 0.0
  %176 = vadd.xlane.f32.xlu0 %v175
  %v177 = vpop.xlane.xlu0 %176
  %v178 = vrcp.pop 64.0
  %v179 = vmul.f32 %v177, %v178
  %v180 = vsub.f32 %v173, %v179
  %v181 = vmul.f32 %v180, %v180
  %v182 = vsel %vm174, %v181, 0.0
  %183 = vadd.xlane.f32.xlu0 %v182
  %v184 = vpop.xlane.xlu0 %183
  %v185 = vmul.f32 %v184, %v178
  %v186 = vadd.f32 %v185, 1e-12
  %v187 = vrsqrt.pop %v186
  %v188 = vmul.f32 %v180, %v187
  %v189 = vld [vmem:[%s5] sm:$0x1]
  %v191 = vlaneseq
  %v192 = vshrl.u32 %v191, 7
  %v193 = vsub.s32 0, %v192
  %v194 = vrot.slane %v189, %v193
  %v196 = vmul.f32 %v188, %v194
  %v197 = vld [vmem:[%s6] sm:$0x1]
  %v199 = vlaneseq
  %v200 = vshrl.u32 %v199, 7
  %v201 = vsub.s32 0, %v200
  %v202 = vrot.slane %v197, %v201
  %v204 = vadd.f32 %v196, %v202
  %v205 = vpack.c.bf16 %v204, %v204
  %v206 = vld [vmem:[%s7] sm:$0xf]
  %v207 = vld [vmem:[%s7 + $0x4] sm:$0xf]
  %v208 = vld [vmem:[%s7 + $0x8] sm:$0xf]
  %v209 = vld [vmem:[%s7 + $0xc] sm:$0xf]
  %v210 = vld [vmem:[%s7 + $0x10] sm:$0xf]
  %v211 = vld [vmem:[%s7 + $0x14] sm:$0xf]
  %v212 = vld [vmem:[%s7 + $0x18] sm:$0xf]
  %v213 = vld [vmem:[%s7 + $0x1c] sm:$0xf]
  %v214 = vld [vmem:[%s8] sm:$0x1]
  %v216 = vlaneseq
  %v217 = vshrl.u32 %v216, 7
  %v218 = vsub.s32 0, %v217
  %v219 = vrot.slane %v214, %v218
  %v229 = vunpack.c.l.b16 %v206
  %v230 = vunpack.c.l.b16 %v207
  %v231 = vunpack.c.l.b16 %v208
  %v232 = vunpack.c.l.b16 %v209
  %v233 = vunpack.c.l.b16 %v210
  %v234 = vunpack.c.l.b16 %v211
  %v235 = vunpack.c.l.b16 %v212
  %v236 = vunpack.c.l.b16 %v213
  %v237 = vpack.c.b16 %v230, %v229
  %v238 = vpack.c.b16 %v232, %v231
  %v239 = vpack.c.b16 %v234, %v233
  %v240 = vpack.c.b16 %v236, %v235
  %v246 = vsel %vm174, %v205, 0
  %248 = vmatprep.subr.bf16.mxu0 0
  %249 = vmatpush1.bf16.msra.mxu0 0
  %250 = vmatprep.subr.bf16.mxu0 0
  %251 = vmatpush1.bf16.msra.mxu0 0
  %252 = vmatprep.subr.bf16.mxu0 0
  %253 = vmatpush1.bf16.msra.mxu0 0
  %254 = vmatprep.subr.bf16.mxu0 0
  %255 = vmatpush1.bf16.msra.mxu0 0
  %256 = vmatprep.subr.bf16.mxu0 0
  %257 = vmatpush1.bf16.msra.mxu0 %v240
  %258 = vmatprep.subr.bf16.mxu0 0
  %259 = vmatpush1.bf16.msra.mxu0 %v239
  %260 = vmatprep.subr.bf16.mxu0 0
  %261 = vmatpush1.bf16.msra.mxu0 %v238
  %262 = vmatprep.subr.bf16.mxu0 0
  %263 = vmatpush1.bf16.msra.mxu0 %v237
  %264 = vmatprep.subr.bf16.mxu0 0
  %265 = vmatpush2.bf16.msra.mxu0 0
  %266 = vmatprep.subr.bf16.mxu0 0
  %267 = vmatpush2.bf16.msra.mxu0 0
  %268 = vmatprep.subr.bf16.mxu0 0
  %269 = vmatpush2.bf16.msra.mxu0 0
  %270 = vmatprep.subr.bf16.mxu0 0
  %271 = vmatpush2.bf16.msra.mxu0 0
  %272 = vmatprep.subr.bf16.mxu0 0
  %273 = vmatpush2.bf16.msra.mxu0 0
  %274 = vmatprep.subr.bf16.mxu0 0
  %275 = vmatpush2.bf16.msra.mxu0 0
  %276 = vmatprep.subr.bf16.mxu0 0
  %277 = vmatpush2.bf16.msra.mxu0 0
  %278 = vmatprep.subr.bf16.mxu0 0
  %279 = vmatpush2.bf16.msra.mxu0 0
  %280 = vmatprep.mubr.bf16.mxu0 0
  %281 = vmatmul.mubr.bf16.gmra.mxu0 %v246
  %v282 = vpop.f32.mrf.mxu0
  %v283 = vadd.f32 %v219, %v282
  %v284 = vpop.f32.mrf.mxu0
  %v285 = vpop.f32.mrf.mxu0
  %v286 = vpop.f32.mrf.mxu0
  %287 = vdwg.mxu0
  %288 = vst [vmem:[%s9] sm:$0xff] %v283
  // Predicated region
  $region38: #{gqa_model_forward.1} parent=0 // pred_check
    _
  $region39: #{gqa_model_forward.1} parent=0 // pred_check_branch
    %290 = sbr.rel (0) target = $region41
  $region40: #{gqa_model_forward.1} parent=0 // pred_region
    _
  $region41: #{gqa_model_forward.1} parent=0 // pred_fallthru
    _
  // Predicated region
  $region42: #{gqa_model_forward.1} parent=0 // pred_check
    _
  $region43: #{gqa_model_forward.1} parent=0 // pred_check_branch
    %292 = sbr.rel (0) target = $region45
  $region44: #{gqa_model_forward.1} parent=0 // pred_region
    _
  $region45: #{gqa_model_forward.1} parent=0 // pred_fallthru
    _

</llo_original>
